<compile_context>
chip_gen: v7x
topology: tpu7x:2x2x1
jax: 0.10.0
libtpu: 0.0.40
codegen_flags: <defaults>
</compile_context>

<pallas_src>
import functools
import math

import numpy as np
import jax
import jax.numpy as jnp
from jax.experimental import pallas as pl
from jax.experimental.pallas import tpu as pltpu


def _round_up(x, m):
    return ((x + m - 1) // m) * m


def _per_row_loss(logits_ref, target_ref, weight_ref):
    """Weighted CE for one (TILE_N, C) tile. Returns a (TILE_N, 1) f32 column."""
    logits = logits_ref[...].astype(jnp.float32)      # (tn, C)
    tgt = target_ref[...]                             # (tn, 1) int32
    w = weight_ref[...].astype(jnp.float32)           # (1, C)
    tn, c = logits.shape

    # one-hot(target) via iota compare (no gather needed)
    cls_idx = jax.lax.broadcasted_iota(jnp.int32, (tn, c), 1)
    onehot = (cls_idx == tgt).astype(jnp.float32)     # (tn, C)

    # numerically-stable log-softmax cross entropy
    m = jnp.max(logits, axis=-1, keepdims=True)                        # (tn, 1)
    lse = jnp.log(jnp.sum(jnp.exp(logits - m), axis=-1, keepdims=True)) + m
    tgt_logit = jnp.sum(logits * onehot, axis=-1, keepdims=True)       # (tn, 1)
    ce = lse - tgt_logit                                               # (tn, 1)

    # ce += ce * weight[target]  ==  ce * (1 + w[t])
    w_t = jnp.sum(w * onehot, axis=-1, keepdims=True)                  # (tn, 1)
    return ce * (1.0 + w_t)                                            # (tn, 1)


def _reduce_kernel(logits_ref, target_ref, weight_ref, out_ref, *,
                   tile_n, tiles_per_group, n_valid, n_pad):
    """Accumulates per-group partial sums of the loss into a (1,1,1) block."""
    g = pl.program_id(0)
    t = pl.program_id(1)

    @pl.when(t == 0)
    def _():
        out_ref[...] = jnp.zeros_like(out_ref)

    loss = _per_row_loss(logits_ref, target_ref, weight_ref)           # (tn, 1)

    if n_pad != n_valid:  # static: mask rows that were padded onto N
        row0 = (g * tiles_per_group + t) * tile_n
        rows = jax.lax.broadcasted_iota(jnp.int32, loss.shape, 0) + row0
        loss = jnp.where(rows < n_valid, loss, 0.0)

    out_ref[...] = out_ref[...] + jnp.sum(loss)


def _none_kernel(logits_ref, target_ref, weight_ref, out_ref):
    """Writes the per-sample loss as a lane-dense (1, 1, TILE_N) row."""
    loss = _per_row_loss(logits_ref, target_ref, weight_ref)           # (tn, 1)
    tn = loss.shape[0]
    # Column -> lane-dense row using only elementwise ops + a sublane reduce
    # (avoids relying on (n,1)->(1,n) reshape/transpose lowering support).
    ri = jax.lax.broadcasted_iota(jnp.int32, (tn, tn), 0)
    ci = jax.lax.broadcasted_iota(jnp.int32, (tn, tn), 1)
    row = jnp.sum(jnp.where(ri == ci, loss, 0.0), axis=0, keepdims=True)  # (1, tn)
    out_ref[...] = jnp.reshape(row, (1, 1, tn))


def balanced_loss(logits, target, class_weight, reduction="mean"):
    """logits: (N, C) float (any dtype), target: (N,) int, class_weight: (C,) f32."""
    n, c = logits.shape
    itemsize = jnp.dtype(logits.dtype).itemsize

    # Row-tile size: keep each logits tile around <= 2 MiB (v7x-safe with double
    # buffering), multiple of 16 (bf16 sublane packing), no bigger than needed.
    cap = 512 if reduction in ("mean", "sum") else 256
    budget = 2 * 1024 * 1024
    tile_n = max(16, min(cap, (budget // max(1, c * itemsize)) // 16 * 16))
    tile_n = min(tile_n, _round_up(n, 16))
    n_pad = _round_up(n, tile_n)
    num_tiles = n_pad // tile_n

    if n_pad != n:
        logits_p = jnp.pad(logits, ((0, n_pad - n), (0, 0)))
        target_p = jnp.pad(target.astype(jnp.int32), ((0, n_pad - n),))
    else:
        logits_p = logits
        target_p = target.astype(jnp.int32)
    target2d = target_p.reshape(n_pad, 1)
    weight2d = class_weight.astype(jnp.float32).reshape(1, c)

    # VMEM budget hint: 2 double-buffered logits tiles + lane-padded targets,
    # weight row, intermediates, headroom.  Clamped to stay v7x-safe.
    logits_tile_bytes = tile_n * c * itemsize
    vmem_limit = int(min(64 * 1024 * 1024,
                         max(32 * 1024 * 1024,
                             4 * logits_tile_bytes + 8 * 1024 * 1024)))

    if reduction in ("mean", "sum"):
        # Small leading parallel axis -> both TensorCores on v7x; harmless on 1-TC chips.
        groups = math.gcd(num_tiles, 8)
        tiles_per_group = num_tiles // groups
        kernel = functools.partial(
            _reduce_kernel, tile_n=tile_n, tiles_per_group=tiles_per_group,
            n_valid=n, n_pad=n_pad)
        partials = pl.pallas_call(
            kernel,
            out_shape=jax.ShapeDtypeStruct((groups, 1, 1), jnp.float32),
            grid_spec=pltpu.PrefetchScalarGridSpec(
                num_scalar_prefetch=0,
                grid=(groups, tiles_per_group),
                in_specs=[
                    pl.BlockSpec((tile_n, c),
                                 lambda g, t: (g * tiles_per_group + t, 0)),
                    pl.BlockSpec((tile_n, 1),
                                 lambda g, t: (g * tiles_per_group + t, 0)),
                    pl.BlockSpec((1, c), lambda g, t: (0, 0)),
                ],
                out_specs=pl.BlockSpec((1, 1, 1), lambda g, t: (g, 0, 0)),
            ),
            compiler_params=pltpu.CompilerParams(
                dimension_semantics=("parallel", "arbitrary"),
                vmem_limit_bytes=vmem_limit),
        )(logits_p, target2d, weight2d)
        total = jnp.sum(partials)
        if reduction == "mean":
            return total / n
        return total

    # reduction == 'none': lane-dense tiled output, reshaped back in the wrapper.
    out = pl.pallas_call(
        _none_kernel,
        out_shape=jax.ShapeDtypeStruct((num_tiles, 1, tile_n), jnp.float32),
        grid_spec=pltpu.PrefetchScalarGridSpec(
            num_scalar_prefetch=0,
            grid=(num_tiles,),
            in_specs=[
                pl.BlockSpec((tile_n, c), lambda i: (i, 0)),
                pl.BlockSpec((tile_n, 1), lambda i: (i, 0)),
                pl.BlockSpec((1, c), lambda i: (0, 0)),
            ],
            out_specs=pl.BlockSpec((1, 1, tile_n), lambda i: (i, 0, 0)),
        ),
        compiler_params=pltpu.CompilerParams(
            dimension_semantics=("parallel",),
            vmem_limit_bytes=vmem_limit),
    )(logits_p, target2d, weight2d)
    return out.reshape(-1)[:n]


def _reference(logits, target, class_weight, reduction="mean"):
    logits = logits.astype(jnp.float32)
    logp = jax.nn.log_softmax(logits, axis=-1)
    ce = -jnp.take_along_axis(logp, target[:, None].astype(jnp.int32), axis=-1)[:, 0]
    ce = ce + ce * class_weight[target]
    if reduction == "mean":
        return ce.mean()
    if reduction == "sum":
        return ce.sum()
    return ce


if __name__ == "__main__":
    # Deterministic parameter init (mirrors BalancedLoss.__init__):
    # num = per-class sample counts; weight[i] = (total - num[i]) / total
    num = np.array([10, 20, 30, 40], dtype=np.float64)
    total = np.sum(num)
    class_weight = jnp.asarray([(total - i) / total for i in num], dtype=jnp.float32)

    N, C = 8, 4
    key = jax.random.PRNGKey(0)
    k1, k2 = jax.random.split(key)
    logits = jax.random.normal(k1, (N, C), dtype=jnp.float32)
    target = jax.random.randint(k2, (N,), 0, C, dtype=jnp.int32)

    # reduction='mean' (module default)
    out_mean = jax.block_until_ready(balanced_loss(logits, target, class_weight, "mean"))
    ref_mean = _reference(logits, target, class_weight, "mean")
    assert jnp.allclose(out_mean, ref_mean, rtol=1e-5, atol=1e-5), (out_mean, ref_mean)

    # reduction='sum'
    out_sum = jax.block_until_ready(balanced_loss(logits, target, class_weight, "sum"))
    ref_sum = _reference(logits, target, class_weight, "sum")
    assert jnp.allclose(out_sum, ref_sum, rtol=1e-5, atol=1e-5), (out_sum, ref_sum)

    # reduction='none' (lane-dense tiled output)
    out_none = jax.block_until_ready(balanced_loss(logits, target, class_weight, "none"))
    ref_none = _reference(logits, target, class_weight, "none")
    assert jnp.allclose(out_none, ref_none, rtol=1e-5, atol=1e-5), (out_none, ref_none)

    # bf16 logits travel over HBM at native width; math is still f32 in-kernel.
    logits_bf16 = logits.astype(jnp.bfloat16)
    out_bf16 = jax.block_until_ready(balanced_loss(logits_bf16, target, class_weight, "mean"))
    ref_bf16 = _reference(logits_bf16, target, class_weight, "mean")
    assert jnp.allclose(out_bf16, ref_bf16, rtol=2e-2, atol=2e-2), (out_bf16, ref_bf16)

    print("KERNEL_OK")
</pallas_src>

<mosaic_0001>
module attributes {stable_mosaic.version = 11 : i64} {
  func.func @_reduce_kernel(%arg0: i32, %arg1: i32, %arg2: memref<16x4xf32, #tpu.memory_space<vmem>>, %arg3: memref<16x1xi32, #tpu.memory_space<vmem>>, %arg4: memref<1x4xf32, #tpu.memory_space<vmem>>, %arg5: memref<1x1x1xf32, #tpu.memory_space<vmem>>) attributes {dimension_semantics = [#tpu.dimension_semantics<parallel>, #tpu.dimension_semantics<arbitrary>], iteration_bounds = array<i64: 1, 1>, scalar_prefetch = 0 : i64, scratch_operands = 0 : i64, tpu.core_type = #tpu.core_type<tc>, window_params = [{transform_indices = @transform_0, window_bounds = array<i64: 16, 4>}, {transform_indices = @transform_1, window_bounds = array<i64: 16, 1>}, {pipeline_mode = #tpu.pipeline_mode<synchronous>, transform_indices = @transform_2, window_bounds = array<i64: 1, 4>}, {transform_indices = @transform_3, window_bounds = array<i64: 1, 1, 1>}]} {
    %c0_i32 = arith.constant 0 : i32
    %0 = arith.cmpi eq, %arg1, %c0_i32 : i32
    %1 = arith.extui %0 : i1 to i32
    %c0_i32_0 = arith.constant 0 : i32
    %2 = arith.cmpi ne, %1, %c0_i32_0 : i32
    scf.if %2 {
      %cst_18 = arith.constant 0.000000e+00 : f32
      %49 = vector.broadcast %cst_18 : f32 to vector<1x1x1xf32>
      %c0_19 = arith.constant 0 : index
      %c0_20 = arith.constant 0 : index
      %c0_21 = arith.constant 0 : index
      %50 = vector.load %arg5[%c0_19, %c0_20, %c0_21] : memref<1x1x1xf32, #tpu.memory_space<vmem>>, vector<1x1x1xf32>
      tpu.vector_store %arg5[%c0_19, %c0_20, %c0_21], %49 {strides = array<i32>} : memref<1x1x1xf32, #tpu.memory_space<vmem>>, vector<1x1x1xf32>,
    } else {
    }
    %c0 = arith.constant 0 : index
    %c0_1 = arith.constant 0 : index
    %3 = vector.load %arg2[%c0, %c0_1] : memref<16x4xf32, #tpu.memory_space<vmem>>, vector<16x4xf32>
    %c0_2 = arith.constant 0 : index
    %c0_3 = arith.constant 0 : index
    %4 = vector.load %arg3[%c0_2, %c0_3] : memref<16x1xi32, #tpu.memory_space<vmem>>, vector<16x1xi32>
    %c0_4 = arith.constant 0 : index
    %c0_5 = arith.constant 0 : index
    %5 = vector.load %arg4[%c0_4, %c0_5] : memref<1x4xf32, #tpu.memory_space<vmem>>, vector<1x4xf32>
    %6 = tpu.iota {dimensions = array<i32: 1>} : vector<16x4xi32>
    %7 = vector.broadcast %4 : vector<16x1xi32> to vector<16x4xi32>
    %8 = arith.cmpi eq, %6, %7 : vector<16x4xi32>
    %9 = arith.extui %8 : vector<16x4xi1> to vector<16x4xi32>
    %10 = arith.sitofp %9 : vector<16x4xi32> to vector<16x4xf32>
    %cst = arith.constant dense<0xFF800000> : vector<16xf32>
    %11 = vector.multi_reduction <maximumf>, %3, %cst [1] : vector<16x4xf32> to vector<16xf32>
    %12 = vector.shape_cast %11 : vector<16xf32> to vector<16x1xf32>
    %13 = vector.broadcast %12 : vector<16x1xf32> to vector<16x4xf32>
    %14 = arith.subf %3, %13 : vector<16x4xf32>
    %15 = math.exp %14 : vector<16x4xf32>
    %cst_6 = arith.constant dense<0.000000e+00> : vector<16xf32>
    %16 = vector.multi_reduction <add>, %15, %cst_6 [1] : vector<16x4xf32> to vector<16xf32>
    %17 = vector.shape_cast %16 : vector<16xf32> to vector<16x1xf32>
    %18 = math.log %17 : vector<16x1xf32>
    %19 = arith.addf %18, %12 : vector<16x1xf32>
    %20 = arith.mulf %3, %10 : vector<16x4xf32>
    %cst_7 = arith.constant dense<0.000000e+00> : vector<16xf32>
    %21 = vector.multi_reduction <add>, %20, %cst_7 [1] : vector<16x4xf32> to vector<16xf32>
    %22 = vector.shape_cast %21 : vector<16xf32> to vector<16x1xf32>
    %23 = arith.subf %19, %22 : vector<16x1xf32>
    %24 = vector.broadcast %5 : vector<1x4xf32> to vector<16x4xf32>
    %25 = arith.mulf %24, %10 : vector<16x4xf32>
    %cst_8 = arith.constant dense<0.000000e+00> : vector<16xf32>
    %26 = vector.multi_reduction <add>, %25, %cst_8 [1] : vector<16x4xf32> to vector<16xf32>
    %27 = vector.shape_cast %26 : vector<16xf32> to vector<16x1xf32>
    %cst_9 = arith.constant 1.000000e+00 : f32
    %28 = vector.broadcast %cst_9 : f32 to vector<16x1xf32>
    %29 = arith.addf %28, %27 : vector<16x1xf32>
    %30 = arith.mulf %23, %29 : vector<16x1xf32>
    %c1_i32 = arith.constant 1 : i32
    %31 = arith.muli %arg0, %c1_i32 : i32
    %32 = arith.addi %31, %arg1 : i32
    %c16_i32 = arith.constant 16 : i32
    %33 = arith.muli %32, %c16_i32 : i32
    %34 = tpu.iota {dimensions = array<i32: 0>} : vector<16x1xi32>
    %35 = vector.broadcast %33 : i32 to vector<16x1xi32>
    %36 = arith.addi %34, %35 : vector<16x1xi32>
    %c8_i32 = arith.constant 8 : i32
    %37 = vector.broadcast %c8_i32 : i32 to vector<16x1xi32>
    %38 = arith.cmpi slt, %36, %37 : vector<16x1xi32>
    %cst_10 = arith.constant 0.000000e+00 : f32
    %39 = vector.broadcast %cst_10 : f32 to vector<16x1xf32>
    %40 = arith.select %38, %30, %39 : vector<16x1xi1>, vector<16x1xf32>
    %c0_11 = arith.constant 0 : index
    %c0_12 = arith.constant 0 : index
    %c0_13 = arith.constant 0 : index
    %41 = vector.load %arg5[%c0_11, %c0_12, %c0_13] : memref<1x1x1xf32, #tpu.memory_space<vmem>>, vector<1x1x1xf32>
    %42 = vector.shape_cast %40 : vector<16x1xf32> to vector<1x16x1xf32>
    %cst_14 = arith.constant dense<0.000000e+00> : vector<1xf32>
    %43 = vector.multi_reduction <add>, %42, %cst_14 [1, 2] : vector<1x16x1xf32> to vector<1xf32>
    %44 = vector.shape_cast %43 : vector<1xf32> to vector<1x1x1xf32>
    %45 = vector.extract %44[0, 0, 0] : f32 from vector<1x1x1xf32>
    %46 = vector.broadcast %45 : f32 to vector<1x1x1xf32>
    %47 = arith.addf %41, %46 : vector<1x1x1xf32>
    %c0_15 = arith.constant 0 : index
    %c0_16 = arith.constant 0 : index
    %c0_17 = arith.constant 0 : index
    %48 = vector.load %arg5[%c0_15, %c0_16, %c0_17] : memref<1x1x1xf32, #tpu.memory_space<vmem>>, vector<1x1x1xf32>
    tpu.vector_store %arg5[%c0_15, %c0_16, %c0_17], %47 {strides = array<i32>} : memref<1x1x1xf32, #tpu.memory_space<vmem>>, vector<1x1x1xf32>,
    return
  }
  func.func @transform_0(%arg0: i32, %arg1: i32) -> (i32, i32) {
    %c1_i32 = arith.constant 1 : i32
    %0 = arith.muli %arg0, %c1_i32 : i32
    %1 = arith.addi %0, %arg1 : i32
    %c0_i32 = arith.constant 0 : i32
    %c0_i32_0 = arith.constant 0 : i32
    return %1, %c0_i32 : i32, i32
  }
  func.func @transform_1(%arg0: i32, %arg1: i32) -> (i32, i32) {
    %c1_i32 = arith.constant 1 : i32
    %0 = arith.muli %arg0, %c1_i32 : i32
    %1 = arith.addi %0, %arg1 : i32
    %c0_i32 = arith.constant 0 : i32
    %c0_i32_0 = arith.constant 0 : i32
    return %1, %c0_i32 : i32, i32
  }
  func.func @transform_2(%arg0: i32, %arg1: i32) -> (i32, i32) {
    %c0_i32 = arith.constant 0 : i32
    %c0_i32_0 = arith.constant 0 : i32
    %c0_i32_1 = arith.constant 0 : i32
    return %c0_i32, %c0_i32_0 : i32, i32
  }
  func.func @transform_3(%arg0: i32, %arg1: i32) -> (i32, i32, i32) {
    %c0_i32 = arith.constant 0 : i32
    %c0_i32_0 = arith.constant 0 : i32
    %c0_i32_1 = arith.constant 0 : i32
    return %arg0, %c0_i32, %c0_i32_0 : i32, i32, i32
  }
}

</mosaic_0001>

<llo_original>
// kernel: tpu_custom_call.1
$region0: #{tpu_custom_call.1}
  #allocation0 [shape = 'u32[]', space=smem, size = 0x4, offset = 0x4, fixed_abs, tag = 'smem constant byte address 0x4 - core index']
  #allocation1 [shape = 'u32[144,128]{1,0:T(1,128)}', space=vmem, size = 0x12000, scoped, tag = 'internal scratch']
  %s0 = inlined_call_operand.vmem [shape: f32[16,4], index: 0, kind: input, shape index: {}]
  %s1 = inlined_call_operand.vmem [shape: s32[16,1], index: 1, kind: input, shape index: {}]
  %s2 = inlined_call_operand.vmem [shape: f32[1,4], index: 2, kind: input, shape index: {}]
  %s3 = inlined_call_operand.hbm [shape: f32[1,1,1], index: 3, kind: output, shape index: {}]
  %s4 = sld [smem:[#allocation0]]
  $region26: #{tpu_custom_call.1} parent=0
    _
  %s6 = ssub.s32 1, %s4
  %s7 = scalar_select 0, %s6, %s4
  $region1: #{tpu_custom_call.1} parent=0
    #allocation2 [shape = 'u8[512]{0}', space=vmem, size = 0x400, scoped, tag = 'output window, operand 0, single buffered']
    #allocation3 [shape = 's32[1]{0}', space=sflag, size = 0x4, scoped, tag = 'scoped memory for tpu_custom_call.1']
    %8 = vsyncpa [#allocation3], 0
    // Predicated region
    $region2: #{tpu_custom_call.1} parent=1 // pred_check
      _
    $region3: #{tpu_custom_call.1} parent=1 // pred_check_branch
      %10 = sbr.rel (0) target = $region5
    $region4: #{tpu_custom_call.1} parent=1 // pred_region
      %s11 = sadd.s32 0, 0
      %s12 = smul.u32 2, %s11
      %p13 = scmp.lt.s32.totalorder %s12, 1
      %s14 = scalar_select %p13, %s12, 1
      %s15 = smul.addr %s14, 8
      %s16 = scalar_lea.vmem %s0, %s15
      %s17 = sadd.s32 0, 0
      %s18 = smul.u32 2, %s17
    $region5: #{tpu_custom_call.1} parent=1 // pred_fallthru
      _
    // Predicated region
    $region6: #{tpu_custom_call.1} parent=1 // pred_check
      _
    $region7: #{tpu_custom_call.1} parent=1 // pred_check_branch
      %20 = sbr.rel (0) target = $region9
    $region8: #{tpu_custom_call.1} parent=1 // pred_region
      %s21 = sadd.s32 0, 0
      %s22 = smul.u32 2, %s21
      %p23 = scmp.lt.s32.totalorder %s22, 1
      %s24 = scalar_select %p23, %s22, 1
      %s25 = smul.addr %s24, 8
      %s26 = scalar_lea.vmem %s1, %s25
      %s27 = sadd.s32 0, 0
      %s28 = smul.u32 2, %s27
    $region9: #{tpu_custom_call.1} parent=1 // pred_fallthru
      _
    // Predicated region
    $region10: #{tpu_custom_call.1} parent=1 // pred_check
      _
    $region11: #{tpu_custom_call.1} parent=1 // pred_check_branch
      %30 = sbr.rel (0) target = $region13
    $region12: #{tpu_custom_call.1} parent=1 // pred_region
      _
    $region13: #{tpu_custom_call.1} parent=1 // pred_fallthru
      _
    %s31 = sadd.s32 0, 0
    %s32 = smul.u32 2, %s31
    %p33 = scmp.lt.s32.totalorder %s32, 1
    %s34 = scalar_select %p33, %s32, 1
    %s35 = smul.addr %s34, 8
    %s36 = scalar_lea.vmem %s0, %s35
    %s37 = sadd.s32 0, 0
    %s38 = smul.u32 2, %s37
    %p39 = scmp.lt.s32.totalorder %s38, 1
    %s40 = scalar_select %p39, %s38, 1
    %s41 = smul.addr %s40, 8
    %s42 = scalar_lea.vmem %s1, %s41
    %s43 = sadd.s32 0, 0
    %s44 = smul.u32 2, %s43
    %p45 = scmp.lt.s32.totalorder %s44, 1
    %s46 = scalar_select %p45, %s44, 1
    %s47 = smul.addr %s46, 8
    %s48 = scalar_lea.vmem %s0, %s47
    %s49 = sadd.s32 0, 0
    %s50 = smul.u32 2, %s49
    %s51 = sadd.s32 0, 0
    %s52 = smul.u32 2, %s51
    %p53 = scmp.lt.s32.totalorder %s52, 1
    %s54 = scalar_select %p53, %s52, 1
    %s55 = smul.addr %s54, 8
    %s56 = scalar_lea.vmem %s1, %s55
    %s57 = sadd.s32 0, 0
    %s58 = smul.u32 2, %s57
    %p59 = scmp.eq.s32.totalorder 0, 0
    // Predicated region
    $region14: #{tpu_custom_call.1} parent=1 // pred_check
      %p60 = pneg %p59
    $region15: #{tpu_custom_call.1} parent=1 // pred_check_branch
      %62 = sbr.rel (%p60) target = $region17
    $region16: #{tpu_custom_call.1} parent=1 // pred_region
      %vm63 = vcmask 0
      %64 = vst.msk [vmem:[#allocation2] sm:$0x1] %vm63, 0.0
    $region17: #{tpu_custom_call.1} parent=1 // pred_fallthru
      _
    %v65 = vld [vmem:[%s48] sm:$0xff]
    %v66 = vld [vmem:[%s48 + $0x8] sm:$0xff]
    %v67 = vld [vmem:[%s56] sm:$0xff]
    %v68 = vld [vmem:[%s56 + $0x8] sm:$0xff]
    %v69 = vld [vmem:[%s2] sm:$0x1]
    %v70 = vlaneseq
    %v71 = vand.u32 %v70, 127
    %72 = vset.pattern.permute.xlu0 0
    %73 = vperm.xlu0 %72, %v67
    %v74 = vpop.permute.xlu0 %73
    %75 = vset.pattern.permute.xlu0 0
    %76 = vperm.xlu0 %75, %v68
    %v77 = vpop.permute.xlu0 %76
    %vm78 = vcmp.eq.s32.totalorder %v71, %v74
    %vm79 = vcmp.eq.s32.totalorder %v71, %v77
    %v80 = vsel %vm78, 1, 0
    %v81 = vsel %vm79, 1, 0
    %v82 = vcvt.s32.f32 %v80
    %v83 = vcvt.s32.f32 %v81
    %vm84 = vcmask 31744
    %v85 = vsel %vm84, %v65, -inf
    %86 = vmax.xlane.f32.xlu0 %v85
    %v87 = vpop.xlane.xlu0 %86
    %v88 = vsel %vm84, %v66, -inf
    %89 = vmax.xlane.f32.xlu0 %v88
    %v90 = vpop.xlane.xlu0 %89
    %v91 = vsub.f32 %v65, %v87
    %v92 = vsub.f32 %v66, %v90
    %v93 = vmul.f32 %v91, 1.442695
    %v94 = vpow.pop %v93
    %v95 = vmul.f32 %v92, 1.442695
    %v96 = vpow.pop %v95
    %v97 = vsel %vm84, %v94, 0.0
    %98 = vadd.xlane.f32.xlu0 %v97
    %v99 = vpop.xlane.xlu0 %98
    %v100 = vsel %vm84, %v96, 0.0
    %101 = vadd.xlane.f32.xlu0 %v100
    %v102 = vpop.xlane.xlu0 %101
    %v103 = vlog2.pop %v99
    %v104 = vmul.f32 %v103, 0.6931472
    %v105 = vlog2.pop %v102
    %v106 = vmul.f32 %v105, 0.6931472
    %v107 = vadd.f32 %v104, %v87
    %v108 = vadd.f32 %v106, %v90
    %v109 = vmul.f32 %v65, %v82
    %v110 = vmul.f32 %v66, %v83
    %v111 = vsel %vm84, %v109, 0.0
    %112 = vadd.xlane.f32.xlu0 %v111
    %v113 = vpop.xlane.xlu0 %112
    %v114 = vsel %vm84, %v110, 0.0
    %115 = vadd.xlane.f32.xlu0 %v114
    %v116 = vpop.xlane.xlu0 %115
    %v117 = vsub.f32 %v107, %v113
    %v118 = vsub.f32 %v108, %v116
    %v120 = vlaneseq
    %v121 = vshrl.u32 %v120, 7
    %v122 = vsub.s32 0, %v121
    %v123 = vrot.slane %v69, %v122
    %v125 = vmul.f32 %v123, %v82
    %v126 = vmul.f32 %v123, %v83
    %v127 = vsel %vm84, %v125, 0.0
    %128 = vadd.xlane.f32.xlu0 %v127
    %v129 = vpop.xlane.xlu0 %128
    %v130 = vsel %vm84, %v126, 0.0
    %131 = vadd.xlane.f32.xlu0 %v130
    %v132 = vpop.xlane.xlu0 %131
    %v133 = vadd.f32 %v129, 1.0
    %v134 = vadd.f32 %v132, 1.0
    %v135 = vmul.f32 %v117, %v133
    %v136 = vmul.f32 %v118, %v134
    %s137 = sadd.s32 0, 0
    %s138 = smul.u32 %s137, 16
    %v139 = vlaneseq
    %v140 = vshrl.u32 %v139, 7
    %v141 = vadd.s32 %v140, 8
    %v142 = vstv %s138
    %v143 = vadd.s32 %v140, %v142
    %v144 = vadd.s32 %v141, %v142
    %vm145 = vcmp.lt.s32.totalorder %v143, 8
    %vm146 = vcmp.lt.s32.totalorder %v144, 8
    %v147 = vsel %vm145, %v135, 0.0
    %v148 = vsel %vm146, %v136, 0.0
    %v149 = vld [vmem:[#allocation2] sm:$0x1]
    %vm150 = vcmask 7168
    %v151 = vsel %vm150, %v147, 0.0
    %v152 = vsel %vm150, %v148, 0.0
    %v153 = vadd.f32 %v151, %v152
    %154 = vadd.xlane.f32.xlu0 %v153
    %v155 = vpop.xlane.xlu0 %154
    %v156 = vrot.slane %v155, 4
    %v157 = vadd.f32 %v155, %v156
    %v158 = vrot.slane %v157, 2
    %v159 = vadd.f32 %v157, %v158
    %v160 = vrot.slane %v159, 1
    %v161 = vadd.f32 %v159, %v160
    %s162 = vtos %v161
    %v163 = vstv %s162
    %v164 = vadd.f32 %v149, %v163
    %vm165 = vcmask 0
    %166 = vst.msk [vmem:[#allocation2] sm:$0x1] %vm165, %v164
    // Predicated region
    $region18: #{tpu_custom_call.1} parent=1 // pred_check
      _
    $region19: #{tpu_custom_call.1} parent=1 // pred_check_branch
      %168 = sbr.rel (0) target = $region21
    $region20: #{tpu_custom_call.1} parent=1 // pred_region
      %s170 = ssub.s32 16, 16
      %171 = vsyncadd [#allocation3], %s170
      %s173 = sshll.u32 [#allocation2], 4
      %s174 = int_to_ptr.vmem [resolvable:$true] %s173
      %176 = dma.vmem_to_hbm [thread:$0]  %s174, 16, %s3, [#allocation3]
    $region21: #{tpu_custom_call.1} parent=1 // pred_fallthru
      _
    // Predicated region
    $region22: #{tpu_custom_call.1} parent=1 // pred_check
      _
    $region23: #{tpu_custom_call.1} parent=1 // pred_check_branch
      %178 = sbr.rel (0) target = $region25
    $region24: #{tpu_custom_call.1} parent=1 // pred_region
      %179 = dma.done [#allocation3], 16
    $region25: #{tpu_custom_call.1} parent=1 // pred_fallthru
      _
    %180 = vsyncpa [#allocation3], 1

</llo_original>
